<compile_context>
chip_gen: v7x
topology: tpu7x:2x2x1
jax: 0.10.0
libtpu: 0.0.40
codegen_flags: <defaults>
</compile_context>

<pallas_src>
import math

import jax
import jax.numpy as jnp
from jax.experimental import pallas as pl
from jax.experimental.pallas import tpu as pltpu


def _round_up(v: int, mult: int) -> int:
    return ((v + mult - 1) // mult) * mult


def _make_arcfc_kernel(s: float, m: float, easy_margin: bool,
                       block_n: int, compute_dtype):
    cos_m = math.cos(m)
    sin_m = math.sin(m)
    th = math.cos(math.pi - m)
    mm = math.sin(math.pi - m) * m
    eps2 = 1e-24  # (F.normalize eps=1e-12)^2: max(||v||, eps) == sqrt(max(||v||^2, eps^2))

    def arcfc_kernel(x_ref, wt_ref, label_ref, out_ref, wn_ref):
        # ---- cache the normalized weight tile once per OUT tile (inner B idx == 0)
        @pl.when(pl.program_id(1) == 0)
        def _():
            w = wt_ref[...].astype(jnp.float32)                       # (D, TN)
            w_inv = jax.lax.rsqrt(
                jnp.maximum(jnp.sum(w * w, axis=0, keepdims=True), eps2))
            wn_ref[...] = (w * w_inv).astype(compute_dtype)

        # ---- normalize the x tile (recomputed per grid step; O(TB*D), tiny vs matmul)
        x = x_ref[...].astype(jnp.float32)                            # (TB, D)
        x_inv = jax.lax.rsqrt(
            jnp.maximum(jnp.sum(x * x, axis=1, keepdims=True), eps2))
        xn = (x * x_inv).astype(compute_dtype)

        # ---- cosine = xn @ wn   ((M,K) x (K,N) on the MXU, f32 accumulation)
        cosine = jnp.dot(xn, wn_ref[...],
                         preferred_element_type=jnp.float32)          # (TB, TN)

        # ---- ArcFace margin (f32 elementwise; clamp 1-cos^2 to avoid NaN)
        sine = jnp.sqrt(jnp.maximum(1.0 - cosine * cosine, 0.0))
        phi = cosine * cos_m - sine * sin_m
        if easy_margin:
            phi = jnp.where(cosine > 0.0, phi, cosine)
        else:
            phi = jnp.where(cosine > th, phi, cosine - mm)

        # ---- one-hot select (tile-local column ids offset by OUT-tile origin) + scale
        col0 = pl.program_id(0) * block_n
        col_ids = col0 + jax.lax.broadcasted_iota(jnp.int32, cosine.shape, 1)
        out = jnp.where(col_ids == label_ref[...], phi, cosine) * s
        out_ref[...] = out.astype(out_ref.dtype)

    return arcfc_kernel


def arcfc_forward(x, weight, label, *, s=30.0, m=0.5, easy_margin=False,
                  block_b=128, block_n=512, compute_dtype=jnp.bfloat16):
    """x: (B, D), weight: (OUT, D), label: (B,) int. Returns (B, OUT) f32."""
    B, D = x.shape
    OUT, D2 = weight.shape
    assert D == D2

    # Tile sizes: lane-dense output (TN % 128 == 0), full sublanes (TB % 8 == 0).
    tb = _round_up(min(block_b, _round_up(B, 8)), 8)
    tn = _round_up(min(block_n, _round_up(OUT, 128)), 128)
    B_pad = _round_up(B, tb)
    OUT_pad = _round_up(OUT, tn)

    x_p = x if B_pad == B else jnp.pad(x, ((0, B_pad - B), (0, 0)))
    lbl = label.astype(jnp.int32).reshape(B, 1)
    lbl_p = lbl if B_pad == B else jnp.pad(
        lbl, ((0, B_pad - B), (0, 0)), constant_values=-1)  # -1 never matches a column
    w_p = weight if OUT_pad == OUT else jnp.pad(
        weight, ((0, OUT_pad - OUT), (0, 0)))
    # Pre-transpose so the MXU RHS is already (K, N): no in-kernel transpose.
    wt = w_p.T                                                        # (D, OUT_pad)

    grid = (OUT_pad // tn, B_pad // tb)  # OUT outer (weight tile resident), B inner
    kernel = _make_arcfc_kernel(s, m, easy_margin, tn, compute_dtype)

    out = pl.pallas_call(
        kernel,
        out_shape=jax.ShapeDtypeStruct((B_pad, OUT_pad), jnp.float32),
        grid_spec=pltpu.PrefetchScalarGridSpec(
            num_scalar_prefetch=0,
            grid=grid,
            in_specs=[
                pl.BlockSpec((tb, D), lambda j, i: (i, 0)),   # x tile
                pl.BlockSpec((D, tn), lambda j, i: (0, j)),   # weight.T tile (once per j)
                pl.BlockSpec((tb, 1), lambda j, i: (i, 0)),   # label tile (tiny)
            ],
            out_specs=pl.BlockSpec((tb, tn), lambda j, i: (i, j)),
            scratch_shapes=[pltpu.VMEM((D, tn), compute_dtype)],  # cached normalized W tile
        ),
        compiler_params=pltpu.CompilerParams(
            # OUT axis can be split across TensorCores; B axis stays sequential
            # because the wn scratch is filled at inner index 0.
            dimension_semantics=("parallel", "arbitrary"),
            vmem_limit_bytes=32 * 1024 * 1024,
        ),
    )(x_p, wt, lbl_p)

    return out[:B, :OUT]


def _xavier_uniform(key, shape):
    # nn.init.xavier_uniform_ for a (out_features, in_features) weight
    fan_out, fan_in = shape
    bound = math.sqrt(6.0 / (fan_in + fan_out))
    return jax.random.uniform(key, shape, jnp.float32, -bound, bound)


def _reference(x, weight, label, *, s=30.0, m=0.5, easy_margin=False):
    # Pure-JAX f32 reference mirroring the PyTorch forward, for correctness check.
    eps = 1e-12
    xn = x / jnp.maximum(jnp.linalg.norm(x, axis=1, keepdims=True), eps)
    wn = weight / jnp.maximum(jnp.linalg.norm(weight, axis=1, keepdims=True), eps)
    cosine = xn @ wn.T
    sine = jnp.sqrt(jnp.maximum(1.0 - cosine ** 2, 0.0))
    phi = cosine * math.cos(m) - sine * math.sin(m)
    th = math.cos(math.pi - m)
    mm = math.sin(math.pi - m) * m
    if easy_margin:
        phi = jnp.where(cosine > 0, phi, cosine)
    else:
        phi = jnp.where(cosine > th, phi, cosine - mm)
    one_hot = jax.nn.one_hot(label, weight.shape[0], dtype=jnp.float32)
    return (one_hot * phi + (1.0 - one_hot) * cosine) * s


if __name__ == "__main__":
    B = 16
    in_features = 256
    out_features = 512

    key = jax.random.PRNGKey(0)
    kx, kw, kl = jax.random.split(key, 3)

    x = jax.random.normal(kx, (B, in_features), jnp.float32)
    weight = _xavier_uniform(kw, (out_features, in_features))
    label = jax.random.randint(kl, (B,), 0, out_features, jnp.int32)

    ref = _reference(x, weight, label, s=30.0, m=0.5, easy_margin=False)

    # Small tiles so the demo exercises the (OUT-tile, B-tile) grid and the
    # cached-wn path:  grid = (512/128, 16/8) = (4, 2).
    # 1) f32 MXU path: tight numerical check of the kernel logic.
    out_f32 = arcfc_forward(x, weight, label, s=30.0, m=0.5, easy_margin=False,
                            block_b=8, block_n=128, compute_dtype=jnp.float32)
    out_f32 = jax.block_until_ready(out_f32)
    assert out_f32.shape == (B, out_features)
    assert jnp.allclose(out_f32, ref, atol=1e-4, rtol=1e-4), "f32 path mismatch vs reference"

    # 2) bf16-input MXU path (production default): looser tolerance for bf16
    #    rounding of the unit vectors feeding the matmul (f32 accumulation).
    out_bf16 = arcfc_forward(x, weight, label, s=30.0, m=0.5, easy_margin=False,
                             block_b=8, block_n=128)  # compute_dtype=bf16 default
    out_bf16 = jax.block_until_ready(out_bf16)
    assert out_bf16.shape == (B, out_features)
    assert jnp.allclose(out_bf16, ref, atol=2e-1, rtol=2e-2), "bf16 path mismatch vs reference"

    print("KERNEL_OK")
</pallas_src>

<mosaic_0001>
module attributes {stable_mosaic.version = 11 : i64} {
  func.func @arcfc_kernel(%arg0: i32, %arg1: i32, %arg2: memref<8x256xf32, #tpu.memory_space<vmem>>, %arg3: memref<256x128xf32, #tpu.memory_space<vmem>>, %arg4: memref<8x1xi32, #tpu.memory_space<vmem>>, %arg5: memref<8x128xf32, #tpu.memory_space<vmem>>, %arg6: memref<256x128xf32, #tpu.memory_space<vmem>>) attributes {dimension_semantics = [#tpu.dimension_semantics<parallel>, #tpu.dimension_semantics<arbitrary>], iteration_bounds = array<i64: 4, 2>, scalar_prefetch = 0 : i64, scratch_operands = 1 : i64, tpu.core_type = #tpu.core_type<tc>, window_params = [{transform_indices = @transform_0, window_bounds = array<i64: 8, 256>}, {transform_indices = @transform_1, window_bounds = array<i64: 256, 128>}, {transform_indices = @transform_2, window_bounds = array<i64: 8, 1>}, {transform_indices = @transform_3, window_bounds = array<i64: 8, 128>}]} {
    %c0_i32 = arith.constant 0 : i32
    %0 = arith.cmpi eq, %arg1, %c0_i32 : i32
    %1 = arith.extui %0 : i1 to i32
    %c0_i32_0 = arith.constant 0 : i32
    %2 = arith.cmpi ne, %1, %c0_i32_0 : i32
    scf.if %2 {
      %c0_17 = arith.constant 0 : index
      %c0_18 = arith.constant 0 : index
      %41 = vector.load %arg3[%c0_17, %c0_18] : memref<256x128xf32, #tpu.memory_space<vmem>>, vector<256x128xf32>
      %42 = arith.mulf %41, %41 : vector<256x128xf32>
      %cst_19 = arith.constant dense<0.000000e+00> : vector<128xf32>
      %43 = vector.multi_reduction <add>, %42, %cst_19 [0] : vector<256x128xf32> to vector<128xf32>
      %44 = vector.shape_cast %43 : vector<128xf32> to vector<1x128xf32>
      %cst_20 = arith.constant 1.000000e-24 : f32
      %45 = vector.broadcast %cst_20 : f32 to vector<1x128xf32>
      %46 = arith.maximumf %44, %45 : vector<1x128xf32>
      %47 = math.rsqrt %46 : vector<1x128xf32>
      %48 = vector.broadcast %47 : vector<1x128xf32> to vector<256x128xf32>
      %49 = arith.mulf %41, %48 : vector<256x128xf32>
      %c0_21 = arith.constant 0 : index
      %c0_22 = arith.constant 0 : index
      %50 = vector.load %arg6[%c0_21, %c0_22] : memref<256x128xf32, #tpu.memory_space<vmem>>, vector<256x128xf32>
      tpu.vector_store %arg6[%c0_21, %c0_22], %49 {strides = array<i32>} : memref<256x128xf32, #tpu.memory_space<vmem>>, vector<256x128xf32>,
    } else {
    }
    %c0 = arith.constant 0 : index
    %c0_1 = arith.constant 0 : index
    %3 = vector.load %arg2[%c0, %c0_1] : memref<8x256xf32, #tpu.memory_space<vmem>>, vector<8x256xf32>
    %4 = arith.mulf %3, %3 : vector<8x256xf32>
    %cst = arith.constant dense<0.000000e+00> : vector<8xf32>
    %5 = vector.multi_reduction <add>, %4, %cst [1] : vector<8x256xf32> to vector<8xf32>
    %6 = vector.shape_cast %5 : vector<8xf32> to vector<8x1xf32>
    %cst_2 = arith.constant 1.000000e-24 : f32
    %7 = vector.broadcast %cst_2 : f32 to vector<8x1xf32>
    %8 = arith.maximumf %6, %7 : vector<8x1xf32>
    %9 = math.rsqrt %8 : vector<8x1xf32>
    %10 = vector.broadcast %9 : vector<8x1xf32> to vector<8x256xf32>
    %11 = arith.mulf %3, %10 : vector<8x256xf32>
    %c0_3 = arith.constant 0 : index
    %c0_4 = arith.constant 0 : index
    %12 = vector.load %arg6[%c0_3, %c0_4] : memref<256x128xf32, #tpu.memory_space<vmem>>, vector<256x128xf32>
    %cst_5 = arith.constant dense<0.000000e+00> : vector<8x128xf32>
    %13 = tpu.matmul %11, %12, %cst_5 {dimension_numbers = #tpu.dot_dimension_numbers<[1], [0], [0], [1], [0, 0, 1, 1], [], []>} : vector<8x256xf32>, vector<256x128xf32>, vector<8x128xf32> -> vector<8x128xf32>
    %14 = arith.mulf %13, %13 : vector<8x128xf32>
    %cst_6 = arith.constant 1.000000e+00 : f32
    %15 = vector.broadcast %cst_6 : f32 to vector<8x128xf32>
    %16 = arith.subf %15, %14 : vector<8x128xf32>
    %cst_7 = arith.constant 0.000000e+00 : f32
    %17 = vector.broadcast %cst_7 : f32 to vector<8x128xf32>
    %18 = arith.maximumf %16, %17 : vector<8x128xf32>
    %19 = math.sqrt %18 : vector<8x128xf32>
    %cst_8 = arith.constant 0.87758255 : f32
    %20 = vector.broadcast %cst_8 : f32 to vector<8x128xf32>
    %21 = arith.mulf %13, %20 : vector<8x128xf32>
    %cst_9 = arith.constant 0.47942555 : f32
    %22 = vector.broadcast %cst_9 : f32 to vector<8x128xf32>
    %23 = arith.mulf %19, %22 : vector<8x128xf32>
    %24 = arith.subf %21, %23 : vector<8x128xf32>
    %cst_10 = arith.constant -0.87758255 : f32
    %25 = vector.broadcast %cst_10 : f32 to vector<8x128xf32>
    %26 = arith.cmpf ogt, %13, %25 : vector<8x128xf32>
    %cst_11 = arith.constant 0.239712775 : f32
    %27 = vector.broadcast %cst_11 : f32 to vector<8x128xf32>
    %28 = arith.subf %13, %27 : vector<8x128xf32>
    %29 = arith.select %26, %24, %28 : vector<8x128xi1>, vector<8x128xf32>
    %c128_i32 = arith.constant 128 : i32
    %30 = arith.muli %arg0, %c128_i32 : i32
    %31 = tpu.iota {dimensions = array<i32: 1>} : vector<8x128xi32>
    %32 = vector.broadcast %30 : i32 to vector<8x128xi32>
    %33 = arith.addi %32, %31 : vector<8x128xi32>
    %c0_12 = arith.constant 0 : index
    %c0_13 = arith.constant 0 : index
    %34 = vector.load %arg4[%c0_12, %c0_13] : memref<8x1xi32, #tpu.memory_space<vmem>>, vector<8x1xi32>
    %35 = vector.broadcast %34 : vector<8x1xi32> to vector<8x128xi32>
    %36 = arith.cmpi eq, %33, %35 : vector<8x128xi32>
    %37 = arith.select %36, %29, %13 : vector<8x128xi1>, vector<8x128xf32>
    %cst_14 = arith.constant 3.000000e+01 : f32
    %38 = vector.broadcast %cst_14 : f32 to vector<8x128xf32>
    %39 = arith.mulf %37, %38 : vector<8x128xf32>
    %c0_15 = arith.constant 0 : index
    %c0_16 = arith.constant 0 : index
    %40 = vector.load %arg5[%c0_15, %c0_16] : memref<8x128xf32, #tpu.memory_space<vmem>>, vector<8x128xf32>
    tpu.vector_store %arg5[%c0_15, %c0_16], %39 {strides = array<i32>} : memref<8x128xf32, #tpu.memory_space<vmem>>, vector<8x128xf32>,
    return
  }
  func.func @transform_0(%arg0: i32, %arg1: i32) -> (i32, i32) {
    %c0_i32 = arith.constant 0 : i32
    %c0_i32_0 = arith.constant 0 : i32
    return %arg1, %c0_i32 : i32, i32
  }
  func.func @transform_1(%arg0: i32, %arg1: i32) -> (i32, i32) {
    %c0_i32 = arith.constant 0 : i32
    %c0_i32_0 = arith.constant 0 : i32
    return %c0_i32, %arg0 : i32, i32
  }
  func.func @transform_2(%arg0: i32, %arg1: i32) -> (i32, i32) {
    %c0_i32 = arith.constant 0 : i32
    %c0_i32_0 = arith.constant 0 : i32
    return %arg1, %c0_i32 : i32, i32
  }
  func.func @transform_3(%arg0: i32, %arg1: i32) -> (i32, i32) {
    %c0_i32 = arith.constant 0 : i32
    return %arg1, %arg0 : i32, i32
  }
}

</mosaic_0001>

<llo_original>
// kernel: tpu_custom_call.1
$region0: #{tpu_custom_call.1}
  #allocation0 [shape = 'u32[]', space=smem, size = 0x4, offset = 0x4, fixed_abs, tag = 'smem constant byte address 0x4 - core index']
  #allocation1 [shape = 'u32[144,128]{1,0:T(1,128)}', space=vmem, size = 0x12000, scoped, tag = 'internal scratch']
  #allocation2 [shape = 'f32[256,128]{1,0:T(8,128)}', space=vmem, size = 0x20000, scoped, tag = 'scratch operand']
  %s0 = inlined_call_operand.hbm [shape: f32[16,256], index: 0, kind: input, shape index: {}]
  %s1 = inlined_call_operand.hbm [shape: f32[256,512], index: 1, kind: input, shape index: {}]
  %s2 = inlined_call_operand.vmem [shape: s32[16,1], index: 2, kind: input, shape index: {}]
  %s3 = inlined_call_operand.hbm [shape: f32[16,512], index: 3, kind: output, shape index: {}]
  %s4 = sld [smem:[#allocation0]]
  $region57: #{tpu_custom_call.1} parent=0
    _
  %s6 = ssub.s32 1, %s4
  %s7 = scalar_select 0, %s6, %s4
  $region1: #{tpu_custom_call.1} parent=0
    #allocation3 [shape = 'u8[16384]{0}', space=vmem, size = 0x4000, scoped, tag = 'input window, operand 0']
    #allocation4 [shape = 's32[2]{0}', space=sflag, size = 0x8, scoped, tag = 'scoped memory for tpu_custom_call.1']
    #allocation5 [shape = 's32[2]{0}', space=sflag, size = 0x8, scoped, tag = 'scoped memory for tpu_custom_call.1']
    #allocation6 [shape = 'u8[262144]{0}', space=vmem, size = 0x40000, scoped, tag = 'input window, operand 1']
    #allocation7 [shape = 's32[2]{0}', space=sflag, size = 0x8, scoped, tag = 'scoped memory for tpu_custom_call.1']
    #allocation8 [shape = 'u8[8192]{0}', space=vmem, size = 0x2000, scoped, tag = 'output window, operand 0']
    %8 = vsyncpa [#allocation4], 0
    %s9 = scalar_lea.sflag [#allocation4], 1
    %10 = vsyncpa %s9, 0
    %11 = vsyncpa [#allocation7], 0
    %s12 = scalar_lea.sflag [#allocation7], 1
    %13 = vsyncpa %s12, 0
    %14 = vsyncpa [#allocation5], 0
    %s15 = scalar_lea.sflag [#allocation5], 1
    %16 = vsyncpa %s15, 0
    loop: start=0, step=1, limit=10
    $region2: #{tpu_custom_call.1} parent=1 // loop_pre_header
      _
    $region3: #{tpu_custom_call.1} parent=1 // loop_header
      %s18 = sphi 0, %s22
      %p19 = scmp.ge.s32.totalorder %s18, 10
      %s25 = sphi 0, %s37
      %s26 = sphi 0, %s33
      %s27 = sphi 0, %s25
      %s28 = sphi 0, %s26
      %s29 = sphi 0, %s27
      %s30 = sphi 0, %s28
      %s40 = sphi 0, %s42
      %s43 = sphi 0, %s40
      %s44 = sphi 0, %s43
      %s60 = sphi 0, %s44
      %s66 = sphi 0, %s68
      %s69 = sphi 0, %s66
      %s70 = sphi 0, %s69
      %s86 = sphi 0, %s70
      %s92 = sphi 0, %s94
      %s95 = sphi 0, %s92
      %s96 = sphi 0, %s95
      %s112 = sphi 0, %s96
      %s120 = sphi 0, %s122
      %s123 = sphi 0, %s120
      %s124 = sphi 0, %s123
      %s140 = sphi 0, %s124
    $region4: #{tpu_custom_call.1} parent=1 // loop_header_branch
      %21 = sbr.rel (%p19) target = $region8
    $region5: #{tpu_custom_call.1} parent=1 // loop_body
      %s23 = ssub.s32 %s18, 1
      %s24 = ssub.s32 %s18, 2
      %s31 = sadd.s32 1, %s26
      %p32 = scmp.ge.s32.totalorder %s31, 2
      %s33 = scalar_select %p32, 0, %s31
      %s34 = sadd.s32 1, %s25
      %s35 = scalar_select %p32, %s34, %s25
      %p36 = scmp.ge.s32.totalorder %s35, 4
      %s37 = scalar_select %p36, 0, %s35
      %s38 = ssub.s32 %s26, %s33
      %p39 = scmp.eq.s32.totalorder %s38, 0
      %s41 = sadd.s32 %s40, 1
      %s42 = scalar_select %p39, %s40, %s41
      %p45 = pneg %p39
      %p46 = scmp.eq.s32.totalorder %s18, 7
      %p47 = por %p45, %p46
      %p48 = scmp.ne.s32.totalorder %s40, %s43
      %p49 = scmp.eq.s32.totalorder %s18, 0
      %p50 = por %p48, %p49
      %p51 = scmp.ne.s32.totalorder %s40, %s43
      %p52 = scmp.eq.s32.totalorder %s23, 7
      %p53 = por %p51, %p52
      %p54 = scmp.ne.s32.totalorder %s43, %s44
      %p55 = scmp.eq.s32.totalorder %s23, 0
      %p56 = por %p54, %p55
      %p57 = scmp.ne.s32.totalorder %s43, %s44
      %p58 = scmp.eq.s32.totalorder %s24, 7
      %p59 = por %p57, %p58
      %p61 = scmp.ne.s32.totalorder %s44, %s60
      %p62 = scmp.eq.s32.totalorder %s24, 0
      %p63 = por %p61, %p62
      %s64 = ssub.s32 %s25, %s37
      %p65 = scmp.eq.s32.totalorder %s64, 0
      %s67 = sadd.s32 %s66, 1
      %s68 = scalar_select %p65, %s66, %s67
      %p71 = pneg %p65
      %p72 = scmp.eq.s32.totalorder %s18, 7
      %p73 = por %p71, %p72
      %p74 = scmp.ne.s32.totalorder %s66, %s69
      %p75 = scmp.eq.s32.totalorder %s18, 0
      %p76 = por %p74, %p75
      %p77 = scmp.ne.s32.totalorder %s66, %s69
      %p78 = scmp.eq.s32.totalorder %s23, 7
      %p79 = por %p77, %p78
      %p80 = scmp.ne.s32.totalorder %s69, %s70
      %p81 = scmp.eq.s32.totalorder %s23, 0
      %p82 = por %p80, %p81
      %p83 = scmp.ne.s32.totalorder %s69, %s70
      %p84 = scmp.eq.s32.totalorder %s24, 7
      %p85 = por %p83, %p84
      %p87 = scmp.ne.s32.totalorder %s70, %s86
      %p88 = scmp.eq.s32.totalorder %s24, 0
      %p89 = por %p87, %p88
      %s90 = ssub.s32 %s26, %s33
      %p91 = scmp.eq.s32.totalorder %s90, 0
      %s93 = sadd.s32 %s92, 1
      %s94 = scalar_select %p91, %s92, %s93
      %p97 = pneg %p91
      %p98 = scmp.eq.s32.totalorder %s18, 7
      %p99 = por %p97, %p98
      %p100 = scmp.ne.s32.totalorder %s92, %s95
      %p101 = scmp.eq.s32.totalorder %s18, 0
      %p102 = por %p100, %p101
      %p103 = scmp.ne.s32.totalorder %s92, %s95
      %p104 = scmp.eq.s32.totalorder %s23, 7
      %p105 = por %p103, %p104
      %p106 = scmp.ne.s32.totalorder %s95, %s96
      %p107 = scmp.eq.s32.totalorder %s23, 0
      %p108 = por %p106, %p107
      %p109 = scmp.ne.s32.totalorder %s95, %s96
      %p110 = scmp.eq.s32.totalorder %s24, 7
      %p111 = por %p109, %p110
      %p113 = scmp.ne.s32.totalorder %s96, %s112
      %p114 = scmp.eq.s32.totalorder %s24, 0
      %p115 = por %p113, %p114
      %s116 = ssub.s32 %s26, %s33
      %s117 = ssub.s32 %s25, %s37
      %s118 = sor.u32 %s116, %s117
      %p119 = scmp.eq.s32.totalorder %s118, 0
      %s121 = sadd.s32 %s120, 1
      %s122 = scalar_select %p119, %s120, %s121
      %p125 = pneg %p119
      %p126 = scmp.eq.s32.totalorder %s18, 7
      %p127 = por %p125, %p126
      %p128 = scmp.ne.s32.totalorder %s120, %s123
      %p129 = scmp.eq.s32.totalorder %s18, 0
      %p130 = por %p128, %p129
      %p131 = scmp.ne.s32.totalorder %s120, %s123
      %p132 = scmp.eq.s32.totalorder %s23, 7
      %p133 = por %p131, %p132
      %p134 = scmp.ne.s32.totalorder %s123, %s124
      %p135 = scmp.eq.s32.totalorder %s23, 0
      %p136 = por %p134, %p135
      %p137 = scmp.ne.s32.totalorder %s123, %s124
      %p138 = scmp.eq.s32.totalorder %s24, 7
      %p139 = por %p137, %p138
      %p141 = scmp.ne.s32.totalorder %s124, %s140
      %p142 = scmp.eq.s32.totalorder %s24, 0
      %p143 = por %p141, %p142
      %p144 = scmp.le.s32.totalorder 1, %s18
      %p145 = scmp.lt.s32.totalorder %s18, 9
      %p146 = pnand %p144, %p145
      %p147 = pneg %p146
      // Predicated region
      $region9: #{tpu_custom_call.1} parent=5 // pred_check
        _
      $region10: #{tpu_custom_call.1} parent=5 // pred_check_branch
        %149 = sbr.rel (%p146) target = $region12
      $region11: #{tpu_custom_call.1} parent=5 // pred_region
        %s150 = ssub.s32 %s18, 1
      $region12: #{tpu_custom_call.1} parent=5 // pred_fallthru
        _
      %p151 = scmp.lt.s32.totalorder %s18, 8
      // Predicated region
      $region13: #{tpu_custom_call.1} parent=5 // pred_check
        %p152 = pneg %p151
      $region14: #{tpu_custom_call.1} parent=5 // pred_check_branch
        %154 = sbr.rel (%p152) target = $region16
      $region15: #{tpu_custom_call.1} parent=5 // pred_region
        // Predicated region
        $region17: #{tpu_custom_call.1} parent=15 // pred_check
          %p155 = pneg %p50
        $region18: #{tpu_custom_call.1} parent=15 // pred_check_branch
          %157 = sbr.rel (%p155) target = $region20
        $region19: #{tpu_custom_call.1} parent=15 // pred_region
          %s158 = sand.u32 %s40, 1
          %s159 = scalar_lea.sflag [#allocation4], %s158
          %s160 = sand.u32 %s40, 1
          %s161 = smul.addr %s160, 16
          %s162 = scalar_lea.vmem [#allocation3], %s161
          %s164 = ssub.s32 256, 256
          %165 = vsyncadd %s159, %s164
          %s166 = smul.addr %s26, 2
          %s167 = smul.addr %s166, 128
          %s168 = scalar_lea.hbm %s0, %s167
          %s170 = sshll.u32 %s162, 4
          %s171 = int_to_ptr.vmem [resolvable:$true] %s170
          %173 = dma.hbm_to_vmem [thread:$0]  %s168, 256, %s171, %s159
        $region20: #{tpu_custom_call.1} parent=15 // pred_fallthru
          _
        // Predicated region
        $region21: #{tpu_custom_call.1} parent=15 // pred_check
          %p174 = pneg %p76
        $region22: #{tpu_custom_call.1} parent=15 // pred_check_branch
          %176 = sbr.rel (%p174) target = $region24
        $region23: #{tpu_custom_call.1} parent=15 // pred_region
          %s177 = sand.u32 %s66, 1
          %s178 = scalar_lea.sflag [#allocation7], %s177
          %s179 = sand.u32 %s66, 1
          %s180 = smul.addr %s179, 256
          %s181 = scalar_lea.vmem [#allocation6], %s180
          %s183 = ssub.s32 4096, 4096
          %184 = vsyncadd %s178, %s183
          %s185 = smul.addr %s25, 128
          %s186 = scalar_lea.hbm %s1, %s185
          %s187 = sshll.u32 %s181, 4
          %s188 = int_to_ptr.vmem [resolvable:$true] %s187
          %193 = dma.hbm_to_vmem [thread:$0]  %s186, 4096, %s188, %s178, 512, 128, 8
        $region24: #{tpu_custom_call.1} parent=15 // pred_fallthru
          _
        // Predicated region
        $region25: #{tpu_custom_call.1} parent=15 // pred_check
          %p194 = pneg %p102
        $region26: #{tpu_custom_call.1} parent=15 // pred_check_branch
          %196 = sbr.rel (%p194) target = $region28
        $region27: #{tpu_custom_call.1} parent=15 // pred_region
          %p197 = scmp.lt.s32.totalorder %s26, 1
          %s198 = scalar_select %p197, %s26, 1
          %s199 = smul.addr %s198, 8
          %s200 = scalar_lea.vmem %s2, %s199
        $region28: #{tpu_custom_call.1} parent=15 // pred_fallthru
          _
      $region16: #{tpu_custom_call.1} parent=5 // pred_fallthru
        _
      %p201 = scmp.le.s32.totalorder 1, %s18
      %p202 = scmp.lt.s32.totalorder %s18, 9
      %p203 = pnand %p201, %p202
      %p204 = pneg %p203
      // Predicated region
      $region29: #{tpu_custom_call.1} parent=5 // pred_check
        _
      $region30: #{tpu_custom_call.1} parent=5 // pred_check_branch
        %206 = sbr.rel (%p203) target = $region32
      $region31: #{tpu_custom_call.1} parent=5 // pred_region
        %s207 = ssub.s32 %s18, 1
        %s208 = sand.u32 %s43, 1
        %s209 = scalar_lea.sflag [#allocation4], %s208
        %s210 = sand.u32 %s43, 1
        %s211 = smul.addr %s210, 16
        %s212 = scalar_lea.vmem [#allocation3], %s211
        // Predicated region
        $region33: #{tpu_custom_call.1} parent=31 // pred_check
          %p213 = pneg %p56
        $region34: #{tpu_custom_call.1} parent=31 // pred_check_branch
          %215 = sbr.rel (%p213) target = $region36
        $region35: #{tpu_custom_call.1} parent=31 // pred_region
          %216 = dma.done %s209, 256
        $region36: #{tpu_custom_call.1} parent=31 // pred_fallthru
          _
        %s217 = sand.u32 %s69, 1
        %s218 = scalar_lea.sflag [#allocation7], %s217
        %s219 = sand.u32 %s69, 1
        %s220 = smul.addr %s219, 256
        %s221 = scalar_lea.vmem [#allocation6], %s220
        // Predicated region
        $region37: #{tpu_custom_call.1} parent=31 // pred_check
          %p222 = pneg %p82
        $region38: #{tpu_custom_call.1} parent=31 // pred_check_branch
          %224 = sbr.rel (%p222) target = $region40
        $region39: #{tpu_custom_call.1} parent=31 // pred_region
          %225 = dma.done %s218, 4096
        $region40: #{tpu_custom_call.1} parent=31 // pred_fallthru
          _
        %s226 = sand.u32 %s43, 1
        %s227 = scalar_lea.sflag [#allocation4], %s226
        %s228 = sand.u32 %s43, 1
        %s229 = smul.addr %s228, 16
        %s230 = scalar_lea.vmem [#allocation3], %s229
        %p231 = pneg %p56
        %p232 = pneg %p53
        %s233 = sand.u32 %s69, 1
        %s234 = scalar_lea.sflag [#allocation7], %s233
        %s235 = sand.u32 %s69, 1
        %s236 = smul.addr %s235, 256
        %s237 = scalar_lea.vmem [#allocation6], %s236
        %p238 = pneg %p82
        %p239 = pneg %p79
        %p240 = scmp.lt.s32.totalorder %s28, 1
        %s241 = scalar_select %p240, %s28, 1
        %s242 = smul.addr %s241, 8
        %s243 = scalar_lea.vmem %s2, %s242
        %p244 = pneg %p108
        %p245 = pneg %p105
        %p246 = pneg %p136
        %p247 = pneg %p133
        %s248 = sand.u32 %s123, 1
        %s249 = scalar_lea.sflag [#allocation5], %s248
        %s250 = sand.u32 %s123, 1
        %s251 = smul.addr %s250, 8
        %s252 = scalar_lea.vmem [#allocation8], %s251
        %p253 = scmp.lt.s32.totalorder %s28, 1
        %s254 = scalar_select %p253, %s28, 1
        %s255 = smul.addr %s254, 8
        %s256 = scalar_lea.vmem %s2, %s255
        %p257 = scmp.eq.s32.totalorder %s28, 0
        // Predicated region
        $region41: #{tpu_custom_call.1} parent=31 // pred_check
          %p258 = pneg %p257
        $region42: #{tpu_custom_call.1} parent=31 // pred_check_branch
          %260 = sbr.rel (%p258) target = $region44
        $region43: #{tpu_custom_call.1} parent=31 // pred_region
          %v261 = vld [vmem:[%s221] sm:$0xff]
          %v262 = vld [vmem:[%s221 + $0x8] sm:$0xff]
          %v263 = vld [vmem:[%s221 + $0x10] sm:$0xff]
          %v264 = vld [vmem:[%s221 + $0x18] sm:$0xff]
          %v265 = vld [vmem:[%s221 + $0x20] sm:$0xff]
          %v266 = vld [vmem:[%s221 + $0x28] sm:$0xff]
          %v267 = vld [vmem:[%s221 + $0x30] sm:$0xff]
          %v268 = vld [vmem:[%s221 + $0x38] sm:$0xff]
          %v269 = vld [vmem:[%s221 + $0x40] sm:$0xff]
          %v270 = vld [vmem:[%s221 + $0x48] sm:$0xff]
          %v271 = vld [vmem:[%s221 + $0x50] sm:$0xff]
          %v272 = vld [vmem:[%s221 + $0x58] sm:$0xff]
          %v273 = vld [vmem:[%s221 + $0x60] sm:$0xff]
          %v274 = vld [vmem:[%s221 + $0x68] sm:$0xff]
          %v275 = vld [vmem:[%s221 + $0x70] sm:$0xff]
          %v276 = vld [vmem:[%s221 + $0x78] sm:$0xff]
          %v277 = vld [vmem:[%s221 + $0x80] sm:$0xff]
          %v278 = vld [vmem:[%s221 + $0x88] sm:$0xff]
          %v279 = vld [vmem:[%s221 + $0x90] sm:$0xff]
          %v280 = vld [vmem:[%s221 + $0x98] sm:$0xff]
          %v281 = vld [vmem:[%s221 + $0xa0] sm:$0xff]
          %v282 = vld [vmem:[%s221 + $0xa8] sm:$0xff]
          %v283 = vld [vmem:[%s221 + $0xb0] sm:$0xff]
          %v284 = vld [vmem:[%s221 + $0xb8] sm:$0xff]
          %v285 = vld [vmem:[%s221 + $0xc0] sm:$0xff]
          %v286 = vld [vmem:[%s221 + $0xc8] sm:$0xff]
          %v287 = vld [vmem:[%s221 + $0xd0] sm:$0xff]
          %v288 = vld [vmem:[%s221 + $0xd8] sm:$0xff]
          %v289 = vld [vmem:[%s221 + $0xe0] sm:$0xff]
          %v290 = vld [vmem:[%s221 + $0xe8] sm:$0xff]
          %v291 = vld [vmem:[%s221 + $0xf0] sm:$0xff]
          %v292 = vld [vmem:[%s221 + $0xf8] sm:$0xff]
          %v293 = vmul.f32 %v261, %v261
          %v294 = vmul.f32 %v262, %v262
          %v295 = vmul.f32 %v263, %v263
          %v296 = vmul.f32 %v264, %v264
          %v297 = vmul.f32 %v265, %v265
          %v298 = vmul.f32 %v266, %v266
          %v299 = vmul.f32 %v267, %v267
          %v300 = vmul.f32 %v268, %v268
          %v301 = vmul.f32 %v269, %v269
          %v302 = vmul.f32 %v270, %v270
          %v303 = vmul.f32 %v271, %v271
          %v304 = vmul.f32 %v272, %v272
          %v305 = vmul.f32 %v273, %v273
          %v306 = vmul.f32 %v274, %v274
          %v307 = vmul.f32 %v275, %v275
          %v308 = vmul.f32 %v276, %v276
          %v309 = vmul.f32 %v277, %v277
          %v310 = vmul.f32 %v278, %v278
          %v311 = vmul.f32 %v279, %v279
          %v312 = vmul.f32 %v280, %v280
          %v313 = vmul.f32 %v281, %v281
          %v314 = vmul.f32 %v282, %v282
          %v315 = vmul.f32 %v283, %v283
          %v316 = vmul.f32 %v284, %v284
          %v317 = vmul.f32 %v285, %v285
          %v318 = vmul.f32 %v286, %v286
          %v319 = vmul.f32 %v287, %v287
          %v320 = vmul.f32 %v288, %v288
          %v321 = vmul.f32 %v289, %v289
          %v322 = vmul.f32 %v290, %v290
          %v323 = vmul.f32 %v291, %v291
          %v324 = vmul.f32 %v292, %v292
          %v325 = vadd.f32 %v293, %v294
          %v326 = vadd.f32 %v325, %v295
          %v327 = vadd.f32 %v326, %v296
          %v328 = vadd.f32 %v327, %v297
          %v329 = vadd.f32 %v328, %v298
          %v330 = vadd.f32 %v329, %v299
          %v331 = vadd.f32 %v330, %v300
          %v332 = vadd.f32 %v331, %v301
          %v333 = vadd.f32 %v332, %v302
          %v334 = vadd.f32 %v333, %v303
          %v335 = vadd.f32 %v334, %v304
          %v336 = vadd.f32 %v335, %v305
          %v337 = vadd.f32 %v336, %v306
          %v338 = vadd.f32 %v337, %v307
          %v339 = vadd.f32 %v338, %v308
          %v340 = vadd.f32 %v339, %v309
          %v341 = vadd.f32 %v340, %v310
          %v342 = vadd.f32 %v341, %v311
          %v343 = vadd.f32 %v342, %v312
          %v344 = vadd.f32 %v343, %v313
          %v345 = vadd.f32 %v344, %v314
          %v346 = vadd.f32 %v345, %v315
          %v347 = vadd.f32 %v346, %v316
          %v348 = vadd.f32 %v347, %v317
          %v349 = vadd.f32 %v348, %v318
          %v350 = vadd.f32 %v349, %v319
          %v351 = vadd.f32 %v350, %v320
          %v352 = vadd.f32 %v351, %v321
          %v353 = vadd.f32 %v352, %v322
          %v354 = vadd.f32 %v353, %v323
          %v355 = vadd.f32 %v354, %v324
          %v356 = vrot.slane %v355, 4
          %v357 = vadd.f32 %v355, %v356
          %v358 = vrot.slane %v357, 2
          %v359 = vadd.f32 %v357, %v358
          %v360 = vrot.slane %v359, 1
          %v361 = vadd.f32 %v359, %v360
          %v362 = vmax.f32 %v361, 1e-24
          %v363 = vrsqrt.pop %v362
          %v364 = vmul.f32 %v261, %v363
          %v365 = vmul.f32 %v262, %v363
          %v366 = vmul.f32 %v263, %v363
          %v367 = vmul.f32 %v264, %v363
          %v368 = vmul.f32 %v265, %v363
          %v369 = vmul.f32 %v266, %v363
          %v370 = vmul.f32 %v267, %v363
          %v371 = vmul.f32 %v268, %v363
          %v372 = vmul.f32 %v269, %v363
          %v373 = vmul.f32 %v270, %v363
          %v374 = vmul.f32 %v271, %v363
          %v375 = vmul.f32 %v272, %v363
          %v376 = vmul.f32 %v273, %v363
          %v377 = vmul.f32 %v274, %v363
          %v378 = vmul.f32 %v275, %v363
          %v379 = vmul.f32 %v276, %v363
          %v380 = vmul.f32 %v277, %v363
          %v381 = vmul.f32 %v278, %v363
          %v382 = vmul.f32 %v279, %v363
          %v383 = vmul.f32 %v280, %v363
          %v384 = vmul.f32 %v281, %v363
          %v385 = vmul.f32 %v282, %v363
          %v386 = vmul.f32 %v283, %v363
          %v387 = vmul.f32 %v284, %v363
          %v388 = vmul.f32 %v285, %v363
          %v389 = vmul.f32 %v286, %v363
          %v390 = vmul.f32 %v287, %v363
          %v391 = vmul.f32 %v288, %v363
          %v392 = vmul.f32 %v289, %v363
          %v393 = vmul.f32 %v290, %v363
          %v394 = vmul.f32 %v291, %v363
          %v395 = vmul.f32 %v292, %v363
          %396 = vst [vmem:[#allocation2] sm:$0xff] %v364
          %397 = vst [vmem:[#allocation2 + $0x8] sm:$0xff] %v365
          %398 = vst [vmem:[#allocation2 + $0x10] sm:$0xff] %v366
          %399 = vst [vmem:[#allocation2 + $0x18] sm:$0xff] %v367
          %400 = vst [vmem:[#allocation2 + $0x20] sm:$0xff] %v368
          %401 = vst [vmem:[#allocation2 + $0x28] sm:$0xff] %v369
          %402 = vst [vmem:[#allocation2 + $0x30] sm:$0xff] %v370
          %403 = vst [vmem:[#allocation2 + $0x38] sm:$0xff] %v371
          %404 = vst [vmem:[#allocation2 + $0x40] sm:$0xff] %v372
          %405 = vst [vmem:[#allocation2 + $0x48] sm:$0xff] %v373
          %406 = vst [vmem:[#allocation2 + $0x50] sm:$0xff] %v374
          %407 = vst [vmem:[#allocation2 + $0x58] sm:$0xff] %v375
          %408 = vst [vmem:[#allocation2 + $0x60] sm:$0xff] %v376
          %409 = vst [vmem:[#allocation2 + $0x68] sm:$0xff] %v377
          %410 = vst [vmem:[#allocation2 + $0x70] sm:$0xff] %v378
          %411 = vst [vmem:[#allocation2 + $0x78] sm:$0xff] %v379
          %412 = vst [vmem:[#allocation2 + $0x80] sm:$0xff] %v380
          %413 = vst [vmem:[#allocation2 + $0x88] sm:$0xff] %v381
          %414 = vst [vmem:[#allocation2 + $0x90] sm:$0xff] %v382
          %415 = vst [vmem:[#allocation2 + $0x98] sm:$0xff] %v383
          %416 = vst [vmem:[#allocation2 + $0xa0] sm:$0xff] %v384
          %417 = vst [vmem:[#allocation2 + $0xa8] sm:$0xff] %v385
          %418 = vst [vmem:[#allocation2 + $0xb0] sm:$0xff] %v386
          %419 = vst [vmem:[#allocation2 + $0xb8] sm:$0xff] %v387
          %420 = vst [vmem:[#allocation2 + $0xc0] sm:$0xff] %v388
          %421 = vst [vmem:[#allocation2 + $0xc8] sm:$0xff] %v389
          %422 = vst [vmem:[#allocation2 + $0xd0] sm:$0xff] %v390
          %423 = vst [vmem:[#allocation2 + $0xd8] sm:$0xff] %v391
          %424 = vst [vmem:[#allocation2 + $0xe0] sm:$0xff] %v392
          %425 = vst [vmem:[#allocation2 + $0xe8] sm:$0xff] %v393
          %426 = vst [vmem:[#allocation2 + $0xf0] sm:$0xff] %v394
          %427 = vst [vmem:[#allocation2 + $0xf8] sm:$0xff] %v395
        $region44: #{tpu_custom_call.1} parent=31 // pred_fallthru
          _
        %v428 = vld [vmem:[%s212] sm:$0xff]
        %v429 = vld [vmem:[%s212 + $0x8] sm:$0xff]
        %v430 = vmul.f32 %v428, %v428
        %v431 = vmul.f32 %v429, %v429
        %v432 = vadd.f32 %v430, %v431
        %433 = vadd.xlane.f32.xlu0 %v432
        %v434 = vpop.xlane.xlu0 %433
        %v435 = vmax.f32 %v434, 1e-24
        %v436 = vrsqrt.pop %v435
        %v437 = vmul.f32 %v428, %v436
        %v438 = vmul.f32 %v429, %v436
        %v439 = vld [vmem:[#allocation2] sm:$0xff]
        %v440 = vld [vmem:[#allocation2 + $0x8] sm:$0xff]
        %v441 = vld [vmem:[#allocation2 + $0x10] sm:$0xff]
        %v442 = vld [vmem:[#allocation2 + $0x18] sm:$0xff]
        %v443 = vld [vmem:[#allocation2 + $0x20] sm:$0xff]
        %v444 = vld [vmem:[#allocation2 + $0x28] sm:$0xff]
        %v445 = vld [vmem:[#allocation2 + $0x30] sm:$0xff]
        %v446 = vld [vmem:[#allocation2 + $0x38] sm:$0xff]
        %v447 = vld [vmem:[#allocation2 + $0x40] sm:$0xff]
        %v448 = vld [vmem:[#allocation2 + $0x48] sm:$0xff]
        %v449 = vld [vmem:[#allocation2 + $0x50] sm:$0xff]
        %v450 = vld [vmem:[#allocation2 + $0x58] sm:$0xff]
        %v451 = vld [vmem:[#allocation2 + $0x60] sm:$0xff]
        %v452 = vld [vmem:[#allocation2 + $0x68] sm:$0xff]
        %v453 = vld [vmem:[#allocation2 + $0x70] sm:$0xff]
        %v454 = vld [vmem:[#allocation2 + $0x78] sm:$0xff]
        %v455 = vld [vmem:[#allocation2 + $0x80] sm:$0xff]
        %v456 = vld [vmem:[#allocation2 + $0x88] sm:$0xff]
        %v457 = vld [vmem:[#allocation2 + $0x90] sm:$0xff]
        %v458 = vld [vmem:[#allocation2 + $0x98] sm:$0xff]
        %v459 = vld [vmem:[#allocation2 + $0xa0] sm:$0xff]
        %v460 = vld [vmem:[#allocation2 + $0xa8] sm:$0xff]
        %v461 = vld [vmem:[#allocation2 + $0xb0] sm:$0xff]
        %v462 = vld [vmem:[#allocation2 + $0xb8] sm:$0xff]
        %v463 = vld [vmem:[#allocation2 + $0xc0] sm:$0xff]
        %v464 = vld [vmem:[#allocation2 + $0xc8] sm:$0xff]
        %v465 = vld [vmem:[#allocation2 + $0xd0] sm:$0xff]
        %v466 = vld [vmem:[#allocation2 + $0xd8] sm:$0xff]
        %v467 = vld [vmem:[#allocation2 + $0xe0] sm:$0xff]
        %v468 = vld [vmem:[#allocation2 + $0xe8] sm:$0xff]
        %v469 = vld [vmem:[#allocation2 + $0xf0] sm:$0xff]
        %v470 = vld [vmem:[#allocation2 + $0xf8] sm:$0xff]
        %471 = vmatprep.subr.mxu0 0.0
        %472 = vmatpush1.msra.mxu0 %v439
        %473 = vmatprep.subr.mxu0 0.0
        %474 = vmatpush1.msra.mxu0 %v440
        %475 = vmatprep.subr.mxu0 0.0
        %476 = vmatpush1.msra.mxu0 %v441
        %477 = vmatprep.subr.mxu0 0.0
        %478 = vmatpush1.msra.mxu0 %v442
        %479 = vmatprep.subr.mxu0 0.0
        %480 = vmatpush1.msra.mxu0 %v443
        %481 = vmatprep.subr.mxu0 0.0
        %482 = vmatpush1.msra.mxu0 %v444
        %483 = vmatprep.subr.mxu0 0.0
        %484 = vmatpush1.msra.mxu0 %v445
        %485 = vmatprep.subr.mxu0 0.0
        %486 = vmatpush1.msra.mxu0 %v446
        %487 = vmatprep.subr.mxu0 0.0
        %488 = vmatpush1.msra.mxu0 %v447
        %489 = vmatprep.subr.mxu0 0.0
        %490 = vmatpush1.msra.mxu0 %v448
        %491 = vmatprep.subr.mxu0 0.0
        %492 = vmatpush1.msra.mxu0 %v449
        %493 = vmatprep.subr.mxu0 0.0
        %494 = vmatpush1.msra.mxu0 %v450
        %495 = vmatprep.subr.mxu0 0.0
        %496 = vmatpush1.msra.mxu0 %v451
        %497 = vmatprep.subr.mxu0 0.0
        %498 = vmatpush1.msra.mxu0 %v452
        %499 = vmatprep.subr.mxu0 0.0
        %500 = vmatpush1.msra.mxu0 %v453
        %501 = vmatprep.subr.mxu0 0.0
        %502 = vmatpush1.msra.mxu0 %v454
        %503 = vmatprep.subr.mxu0 0.0
        %504 = vmatpush1.msra.mxu0 %v455
        %505 = vmatprep.subr.mxu0 0.0
        %506 = vmatpush1.msra.mxu0 %v456
        %507 = vmatprep.subr.mxu0 0.0
        %508 = vmatpush1.msra.mxu0 %v457
        %509 = vmatprep.subr.mxu0 0.0
        %510 = vmatpush1.msra.mxu0 %v458
        %511 = vmatprep.subr.mxu0 0.0
        %512 = vmatpush1.msra.mxu0 %v459
        %513 = vmatprep.subr.mxu0 0.0
        %514 = vmatpush1.msra.mxu0 %v460
        %515 = vmatprep.subr.mxu0 0.0
        %516 = vmatpush1.msra.mxu0 %v461
        %517 = vmatprep.subr.mxu0 0.0
        %518 = vmatpush1.msra.mxu0 %v462
        %519 = vmatprep.subr.mxu0 0.0
        %520 = vmatpush1.msra.mxu0 %v463
        %521 = vmatprep.subr.mxu0 0.0
        %522 = vmatpush1.msra.mxu0 %v464
        %523 = vmatprep.subr.mxu0 0.0
        %524 = vmatpush1.msra.mxu0 %v465
        %525 = vmatprep.subr.mxu0 0.0
        %526 = vmatpush1.msra.mxu0 %v466
        %527 = vmatprep.subr.mxu0 0.0
        %528 = vmatpush1.msra.mxu0 %v467
        %529 = vmatprep.subr.mxu0 0.0
        %530 = vmatpush1.msra.mxu0 %v468
        %531 = vmatprep.subr.mxu0 0.0
        %532 = vmatpush1.msra.mxu0 %v469
        %533 = vmatprep.subr.mxu0 0.0
        %534 = vmatpush1.msra.mxu0 %v470
        %535 = vmatprep.mubr.f32.mxu0 %v438
        %536 = vmatmul.mubr.f32.gmra.mrb[0].mxu0 %v437
        %v537 = vpop.f32.mrb[0].mxu0
        %v538 = vadd.f32 0.0, %v537
        %v539 = vpop.f32.mrb[0].mxu0
        %540 = vdwg.mxu0
        %v541 = vmul.f32 %v538, %v538
        %v542 = vsub.f32 1.0, %v541
        %v543 = vmax.f32 %v542, 0.0
        %v544 = vrsqrt.pop %v543
        %v545 = vmul.f32 %v543, %v544
        %vm546 = vcmp.eq.f32.partialorder %v543, inf
        %v547 = vsel %vm546, %v543, %v545
        %vm548 = vcmp.eq.f32.partialorder %v543, 0.0
        %v549 = vand.u32 %v543, 2147483648
        %v550 = vsel %vm548, %v549, %v547
        %v551 = vmul.f32 %v538, 0.87758255
        %v552 = vmul.f32 %v550, 0.47942555
        %v553 = vsub.f32 %v551, %v552
        %vm554 = vcmp.gt.f32.partialorder %v538, -0.87758255
        %v555 = vsub.f32 %v538, 0.23971277
        %v556 = vsel %vm554, %v553, %v555
        %s557 = smul.u32 %s27, 128
        %v558 = vlaneseq
        %v559 = vand.u32 %v558, 127
        %v560 = vstv %s557
        %v561 = vadd.s32 %v560, %v559
        %v562 = vld [vmem:[%s256] sm:$0xff]
        %563 = vset.pattern.permute.xlu0 0
        %564 = vperm.xlu0 %563, %v562
        %v565 = vpop.permute.xlu0 %564
        %vm566 = vcmp.eq.s32.totalorder %v561, %v565
        %v567 = vsel %vm566, %v556, %v538
        %v568 = vmul.f32 %v567, 30.0
        %569 = vst [vmem:[%s252] sm:$0xff] %v568
        %s570 = sand.u32 %s123, 1
        %s571 = scalar_lea.sflag [#allocation5], %s570
        %s572 = sand.u32 %s123, 1
        %s573 = smul.addr %s572, 8
        %s574 = scalar_lea.vmem [#allocation8], %s573
        // Predicated region
        $region45: #{tpu_custom_call.1} parent=31 // pred_check
          %p575 = pneg %p133
        $region46: #{tpu_custom_call.1} parent=31 // pred_check_branch
          %577 = sbr.rel (%p575) target = $region48
        $region47: #{tpu_custom_call.1} parent=31 // pred_region
          %s579 = ssub.s32 128, 128
          %580 = vsyncadd %s571, %s579
          %s581 = smul.addr %s28, 4
          %s582 = sadd.s32 %s27, %s581
          %s583 = smul.addr %s582, 128
          %s584 = scalar_lea.hbm %s3, %s583
          %s586 = sshll.u32 %s574, 4
          %s587 = int_to_ptr.vmem [resolvable:$true] %s586
          %589 = dma.vmem_to_hbm [thread:$0]  %s587, 128, %s584, %s571
        $region48: #{tpu_custom_call.1} parent=31 // pred_fallthru
          _
      $region32: #{tpu_custom_call.1} parent=5 // pred_fallthru
        _
      %p590 = scmp.le.s32.totalorder 2, %s18
      // Predicated region
      $region49: #{tpu_custom_call.1} parent=5 // pred_check
        %p591 = pneg %p590
      $region50: #{tpu_custom_call.1} parent=5 // pred_check_branch
        %593 = sbr.rel (%p591) target = $region52
      $region51: #{tpu_custom_call.1} parent=5 // pred_region
        %s594 = ssub.s32 %s18, 2
        // Predicated region
        $region53: #{tpu_custom_call.1} parent=51 // pred_check
          %p595 = pneg %p139
        $region54: #{tpu_custom_call.1} parent=51 // pred_check_branch
          %597 = sbr.rel (%p595) target = $region56
        $region55: #{tpu_custom_call.1} parent=51 // pred_region
          %s598 = sand.u32 %s124, 1
          %s599 = scalar_lea.sflag [#allocation5], %s598
          %s600 = sand.u32 %s124, 1
          %s601 = smul.addr %s600, 8
          %s602 = scalar_lea.vmem [#allocation8], %s601
          %603 = dma.done %s599, 128
        $region56: #{tpu_custom_call.1} parent=51 // pred_fallthru
          _
      $region52: #{tpu_custom_call.1} parent=5 // pred_fallthru
        _
    $region6: #{tpu_custom_call.1} parent=1 // loop_footer
      %s22 = sadd.s32 1, %s18
    $region7: #{tpu_custom_call.1} parent=1 // loop_footer_branch
      %17 = sbr.rel target = $region3
    $region8: #{tpu_custom_call.1} parent=1 // loop_exit
      _
    %604 = vsyncpa [#allocation4], 1
    %s605 = scalar_lea.sflag [#allocation4], 1
    %606 = vsyncpa %s605, 1
    %607 = vsyncpa [#allocation7], 1
    %s608 = scalar_lea.sflag [#allocation7], 1
    %609 = vsyncpa %s608, 1
    %610 = vsyncpa [#allocation5], 1
    %s611 = scalar_lea.sflag [#allocation5], 1
    %612 = vsyncpa %s611, 1

</llo_original>
